<compile_context>
chip_gen: v5e
topology: v5e:2x2
jax: 0.10.0
libtpu: 0.0.40
codegen_flags: <defaults>
</compile_context>

<pallas_src>
import functools

import jax
import jax.numpy as jnp
from jax.experimental import pallas as pl
from jax.experimental.pallas import tpu as pltpu

_MIB = 1024 * 1024


def _round_up(x, m):
    return ((x + m - 1) // m) * m


def _chip_vmem_bytes():
    """Physical VMEM of the attached TPU (trace-time query, safe fallback)."""
    try:
        return int(pltpu.get_tpu_info().vmem_capacity_bytes)
    except Exception:
        # Unknown chip -> assume the smallest (64 MiB, v7x-style) so the
        # chosen tiles can never overflow physical VMEM.
        return 64 * _MIB


def _budget_and_limit():
    """(per-input block budget in bytes, vmem_limit_bytes), sized per chip."""
    cap = _chip_vmem_bytes()
    if cap >= 100 * _MIB:            # v5e / v6e: 128 MiB physical VMEM
        return 8 * _MIB, 64 * _MIB
    return 6 * _MIB, 48 * _MIB       # v7x: 64 MiB physical VMEM -> headroom


def _choose_tiles(rows, cols, itemsize, budget_bytes):
    """Pick (row_tile, n_rb, col_tile, n_cb) under the (8,128) constraint.

    * budget is counted in f32-equivalent elements so the f32 intermediates
      (bf16 upcasts, diff, square) stay bounded as well;
    * multi-block axes use granule-multiple tiles (8 f32 / 16 bf16 / 32 int8)
      with the ragged tail masked in-kernel; single-block axes use the full
      extent (always legal, no mask, no wasted steps);
    * column tiles (nearly) divide cols so the last block is not mostly OOB;
    * we aim for >= 2 row blocks (the row axis is the 'parallel' one -> v7x
      megacore) and >= 2 blocks total (input/compute pipelining).
    """
    budget_elems = max(8 * 128, budget_bytes // 4)   # f32-equivalent elements
    granule = {1: 32, 2: 16}.get(itemsize, 8)

    # ---- sublane (row) axis ----
    max_row_tile = max(granule, (budget_elems // 128) // granule * granule)
    if rows >= 2 * granule:
        # >= 2 row blocks when possible (same total step count, enables
        # megacore sharding on two-TC chips).
        row_tile = min(_round_up(pl.cdiv(rows, 2), granule), max_row_tile)
    else:
        row_tile = rows                      # tiny: single full-extent block
    n_rb = pl.cdiv(rows, row_tile)
    if n_rb == 1:
        row_tile = rows                      # full extent -> legal, no mask

    # ---- lane (col) axis ----
    max_col_tile = max(128, (budget_elems // max(row_tile, 1)) // 128 * 128)
    if cols <= max_col_tile:
        n_cb, col_tile = 1, cols             # full extent -> legal, no mask
    else:
        n_cb = pl.cdiv(cols, max_col_tile)
        col_tile = _round_up(pl.cdiv(cols, n_cb), 128)   # divisor-friendly
        n_cb = pl.cdiv(cols, col_tile)

    # Degenerate (1, 1) grid: split the lane axis so the DMA of block 1 can
    # overlap the compute of block 0 (and 2-TC chips see >= 2 blocks).
    if n_rb == 1 and n_cb == 1 and cols >= 256:
        col_tile = _round_up(pl.cdiv(cols, 2), 128)
        n_cb = pl.cdiv(cols, col_tile)

    return row_tile, n_rb, col_tile, n_cb


def _mse_partial_kernel(x_ref, t_ref, o_ref, *, rows, cols, row_tile, col_tile,
                        need_row_mask, need_col_mask, inv_n):
    """Accumulate sum((x - t)^2) / n_elems of this block into its row block's
    persistent (8,128) VMEM accumulator (resident across the column axis)."""
    j = pl.program_id(1)

    @pl.when(j == 0)
    def _init():
        o_ref[...] = jnp.zeros_like(o_ref)

    # Upcast each operand before subtracting (exact for f32, faithful for bf16).
    d = x_ref[...].astype(jnp.float32) - t_ref[...].astype(jnp.float32)
    dd = d * d

    # Ragged tails: thin per-axis iota masks, broadcast inside one select.
    # (Select, not arithmetic -> NaN garbage in boundary padding cannot leak.)
    mask = None
    if need_row_mask:
        r = (jax.lax.broadcasted_iota(jnp.int32, (row_tile, 1), 0)
             + pl.program_id(0) * row_tile)
        mask = r < rows
    if need_col_mask:
        c = (jax.lax.broadcasted_iota(jnp.int32, (1, col_tile), 1)
             + j * col_tile)
        cm = c < cols
        mask = cm if mask is None else (mask & cm)
    if mask is not None:
        dd = jnp.where(mask, dd, jnp.float32(0.0))

    # 1/n_elems folded in here; the wrapper only sums n_rb scalars.
    o_ref[...] += jnp.sum(dd) * inv_n


def _content_loss_impl(x, target):
    """F.mse_loss(x, target, reduction='mean') for NCHW feature maps."""
    assert x.shape == target.shape and x.ndim == 4
    n, c, h, w = x.shape
    rows, cols = n * c, h * w
    n_elems = rows * cols

    # Contiguous reshape only -- no padding, no extra HBM copies.
    x2 = x.reshape(rows, cols)
    t2 = target.reshape(rows, cols)

    itemsize = jnp.dtype(x.dtype).itemsize
    budget_bytes, vmem_limit = _budget_and_limit()
    row_tile, n_rb, col_tile, n_cb = _choose_tiles(rows, cols, itemsize,
                                                   budget_bytes)
    need_row_mask = n_rb * row_tile > rows
    need_col_mask = n_cb * col_tile > cols

    kernel = functools.partial(
        _mse_partial_kernel,
        rows=rows, cols=cols, row_tile=row_tile, col_tile=col_tile,
        need_row_mask=need_row_mask, need_col_mask=need_col_mask,
        inv_n=1.0 / n_elems)

    partials = pl.pallas_call(
        kernel,
        out_shape=jax.ShapeDtypeStruct((n_rb * 8, 128), jnp.float32),
        grid_spec=pltpu.PrefetchScalarGridSpec(
            num_scalar_prefetch=0,
            grid=(n_rb, n_cb),
            in_specs=[
                pl.BlockSpec((row_tile, col_tile), lambda i, j: (i, j)),
                pl.BlockSpec((row_tile, col_tile), lambda i, j: (i, j)),
            ],
            # One (8,128) accumulator per row block, resident across the
            # column (reduction) axis.
            out_specs=pl.BlockSpec((8, 128), lambda i, j: (i, 0)),
        ),
        compiler_params=pltpu.CompilerParams(
            # Row blocks are independent -> "parallel" (v7x megacore);
            # the column axis carries the accumulator -> "arbitrary".
            dimension_semantics=("parallel", "arbitrary"),
            vmem_limit_bytes=vmem_limit,
        ),
    )(x2, t2)

    # Each row block's tile holds its (already /n_elems-scaled) partial sum
    # replicated; pick one element per row block and add them up (tiny, fused
    # into this jitted wrapper).
    return jnp.sum(partials.reshape(n_rb, 8, 128)[:, 0, 0])


content_loss_pallas = jax.jit(_content_loss_impl)


class ContentLoss:
    """JAX port of style_transfer.ContentLoss: F.mse_loss(input, target)."""

    def __init__(self, target):
        self.target = target

    def __call__(self, x):
        return content_loss_pallas(x, self.target)


class LayerApply:
    """JAX/Pallas port of style_transfer.LayerApply.

    __call__(input) == module(input[layer]) where `input` is a dict of
    per-layer VGG feature maps (the usage in style_transfer.py).
    """

    def __init__(self, module, layer):
        self.module = module
        self.layer = layer

    def __call__(self, feats):
        return self.module(feats[self.layer])


if __name__ == "__main__":
    key = jax.random.PRNGKey(0)
    k1, k2, k3, k4, k5 = jax.random.split(key, 5)

    # Two "layers" of VGG-like features, NCHW.
    feats = {
        "relu1_1": jax.random.normal(k1, (2, 4, 16, 16), jnp.float32),
        "relu2_1": jax.random.normal(k2, (2, 4, 16, 16), jnp.float32),
    }
    target = jax.random.normal(k3, (2, 4, 16, 16), jnp.float32)

    layer_apply = LayerApply(ContentLoss(target), "relu2_1")
    loss = jax.block_until_ready(layer_apply(feats))
    ref = jnp.mean((feats["relu2_1"] - target) ** 2)
    assert jnp.allclose(loss, ref, rtol=1e-5, atol=1e-6), (loss, ref)

    # Ragged bf16 case: rows (N*C=6) below the sublane granule and lane extent
    # 240 handled as full-extent blocks; bf16 upcast to f32 inside the kernel.
    xr = jax.random.normal(k4, (2, 3, 12, 20), jnp.float32).astype(jnp.bfloat16)
    tr = jax.random.normal(k5, (2, 3, 12, 20), jnp.float32).astype(jnp.bfloat16)
    loss2 = jax.block_until_ready(content_loss_pallas(xr, tr))
    ref2 = jnp.mean((xr.astype(jnp.float32) - tr.astype(jnp.float32)) ** 2)
    assert jnp.allclose(loss2, ref2, rtol=1e-5, atol=1e-6), (loss2, ref2)

    # Multi row-block case with a ragged row tail (rows=24, row_tile=16).
    xs = jax.random.normal(k4, (1, 24, 40, 33), jnp.float32)
    ts = jax.random.normal(k5, (1, 24, 40, 33), jnp.float32)
    loss3 = jax.block_until_ready(content_loss_pallas(xs, ts))
    ref3 = jnp.mean((xs - ts) ** 2)
    assert jnp.allclose(loss3, ref3, rtol=1e-5, atol=1e-6), (loss3, ref3)

    # Degenerate-grid split + ragged column tail (cols=400 -> 2x256 blocks).
    xc = jax.random.normal(k4, (2, 4, 20, 20), jnp.float32)
    tc = jax.random.normal(k5, (2, 4, 20, 20), jnp.float32)
    loss4 = jax.block_until_ready(content_loss_pallas(xc, tc))
    ref4 = jnp.mean((xc - tc) ** 2)
    assert jnp.allclose(loss4, ref4, rtol=1e-5, atol=1e-6), (loss4, ref4)

    print("KERNEL_OK")
</pallas_src>

<mosaic_0001>
module attributes {stable_mosaic.version = 11 : i64} {
  func.func @_mse_partial_kernel(%arg0: i32, %arg1: i32, %arg2: memref<8x128xf32, #tpu.memory_space<vmem>>, %arg3: memref<8x128xf32, #tpu.memory_space<vmem>>, %arg4: memref<8x128xf32, #tpu.memory_space<vmem>>) attributes {dimension_semantics = [#tpu.dimension_semantics<parallel>, #tpu.dimension_semantics<arbitrary>], iteration_bounds = array<i64: 1, 2>, scalar_prefetch = 0 : i64, scratch_operands = 0 : i64, tpu.core_type = #tpu.core_type<tc>, window_params = [{transform_indices = @transform_0, window_bounds = array<i64: 8, 128>}, {transform_indices = @transform_1, window_bounds = array<i64: 8, 128>}, {transform_indices = @transform_2, window_bounds = array<i64: 8, 128>}]} {
    %c0_i32 = arith.constant 0 : i32
    %0 = arith.cmpi eq, %arg1, %c0_i32 : i32
    %1 = arith.extui %0 : i1 to i32
    %c0_i32_0 = arith.constant 0 : i32
    %2 = arith.cmpi ne, %1, %c0_i32_0 : i32
    scf.if %2 {
      %cst_9 = arith.constant 0.000000e+00 : f32
      %16 = vector.broadcast %cst_9 : f32 to vector<8x128xf32>
      %c0_10 = arith.constant 0 : index
      %c0_11 = arith.constant 0 : index
      %17 = vector.load %arg4[%c0_10, %c0_11] : memref<8x128xf32, #tpu.memory_space<vmem>>, vector<8x128xf32>
      tpu.vector_store %arg4[%c0_10, %c0_11], %16 {strides = array<i32>} : memref<8x128xf32, #tpu.memory_space<vmem>>, vector<8x128xf32>,
    } else {
    }
    %c0 = arith.constant 0 : index
    %c0_1 = arith.constant 0 : index
    %3 = vector.load %arg2[%c0, %c0_1] : memref<8x128xf32, #tpu.memory_space<vmem>>, vector<8x128xf32>
    %c0_2 = arith.constant 0 : index
    %c0_3 = arith.constant 0 : index
    %4 = vector.load %arg3[%c0_2, %c0_3] : memref<8x128xf32, #tpu.memory_space<vmem>>, vector<8x128xf32>
    %5 = arith.subf %3, %4 : vector<8x128xf32>
    %6 = arith.mulf %5, %5 : vector<8x128xf32>
    %c0_4 = arith.constant 0 : index
    %c0_5 = arith.constant 0 : index
    %7 = vector.load %arg4[%c0_4, %c0_5] : memref<8x128xf32, #tpu.memory_space<vmem>>, vector<8x128xf32>
    %8 = vector.shape_cast %6 : vector<8x128xf32> to vector<1x8x128xf32>
    %cst = arith.constant dense<0.000000e+00> : vector<1xf32>
    %9 = vector.multi_reduction <add>, %8, %cst [1, 2] : vector<1x8x128xf32> to vector<1xf32>
    %10 = vector.shape_cast %9 : vector<1xf32> to vector<1x1x1xf32>
    %11 = vector.extract %10[0, 0, 0] : f32 from vector<1x1x1xf32>
    %cst_6 = arith.constant 4.8828125E-4 : f32
    %12 = arith.mulf %11, %cst_6 : f32
    %13 = vector.broadcast %12 : f32 to vector<8x128xf32>
    %14 = arith.addf %7, %13 : vector<8x128xf32>
    %c0_7 = arith.constant 0 : index
    %c0_8 = arith.constant 0 : index
    %15 = vector.load %arg4[%c0_7, %c0_8] : memref<8x128xf32, #tpu.memory_space<vmem>>, vector<8x128xf32>
    tpu.vector_store %arg4[%c0_7, %c0_8], %14 {strides = array<i32>} : memref<8x128xf32, #tpu.memory_space<vmem>>, vector<8x128xf32>,
    return
  }
  func.func @transform_0(%arg0: i32, %arg1: i32) -> (i32, i32) {
    %c0_i32 = arith.constant 0 : i32
    return %arg0, %arg1 : i32, i32
  }
  func.func @transform_1(%arg0: i32, %arg1: i32) -> (i32, i32) {
    %c0_i32 = arith.constant 0 : i32
    return %arg0, %arg1 : i32, i32
  }
  func.func @transform_2(%arg0: i32, %arg1: i32) -> (i32, i32) {
    %c0_i32 = arith.constant 0 : i32
    %c0_i32_0 = arith.constant 0 : i32
    return %arg0, %c0_i32 : i32, i32
  }
}

</mosaic_0001>

<llo_original>
// kernel: _content_loss_impl.1
$region0: #{_content_loss_impl.1}
  #allocation0 [shape = 'u32[]', space=smem, size = 0x4, offset = 0x4, fixed_abs, tag = 'smem constant byte address 0x4 - core index']
  #allocation1 [shape = 'u32[72,128]{1,0:T(1,128)}', space=vmem, size = 0x9000, scoped, tag = 'internal scratch']
  %s0 = inlined_call_operand.vmem [shape: f32[8,256], index: 0, kind: input, shape index: {}]
  %s1 = inlined_call_operand.vmem [shape: f32[8,256], index: 1, kind: input, shape index: {}]
  %s2 = inlined_call_operand.vmem [shape: f32[8,128], index: 2, kind: output, shape index: {}]
  %s3 = sld [smem:[#allocation0]]
  $region45: #{_content_loss_impl.1} parent=0
    _
  %s5 = ssub.s32 1, %s3
  %s6 = scalar_select 0, %s5, %s3
  loop: start=0, step=1, limit=4
  $region2: #{_content_loss_impl.1} parent=0 // loop_pre_header
    _
  $region3: #{_content_loss_impl.1} parent=0 // loop_header
    %s8 = sphi 0, %s12
    %p9 = scmp.ge.s32.totalorder %s8, 4
    %s15 = sphi 0, %s27
    %s16 = sphi 0, %s23
    %s17 = sphi 0, %s15
    %s18 = sphi 0, %s16
    %s19 = sphi 0, %s17
    %s20 = sphi 0, %s18
    %s32 = sphi 0, %s34
    %s35 = sphi 0, %s32
    %s36 = sphi 0, %s35
    %s52 = sphi 0, %s36
    %s60 = sphi 0, %s62
    %s63 = sphi 0, %s60
    %s64 = sphi 0, %s63
    %s80 = sphi 0, %s64
    %s86 = sphi 0, %s88
    %s89 = sphi 0, %s86
    %s90 = sphi 0, %s89
    %s106 = sphi 0, %s90
  $region4: #{_content_loss_impl.1} parent=0 // loop_header_branch
    %11 = sbr.rel (%p9) target = $region8
  $region5: #{_content_loss_impl.1} parent=0 // loop_body
    %s13 = ssub.s32 %s8, 1
    %s14 = ssub.s32 %s8, 2
    %s21 = sadd.s32 1, %s16
    %p22 = scmp.ge.s32.totalorder %s21, 2
    %s23 = scalar_select %p22, 0, %s21
    %s24 = sadd.s32 1, %s15
    %s25 = scalar_select %p22, %s24, %s15
    %p26 = scmp.ge.s32.totalorder %s25, 1
    %s27 = scalar_select %p26, 0, %s25
    %s28 = ssub.s32 %s15, %s27
    %s29 = ssub.s32 %s16, %s23
    %s30 = sor.u32 %s28, %s29
    %p31 = scmp.eq.s32.totalorder %s30, 0
    %s33 = sadd.s32 %s32, 1
    %s34 = scalar_select %p31, %s32, %s33
    %p37 = pneg %p31
    %p38 = scmp.eq.s32.totalorder %s8, 1
    %p39 = por %p37, %p38
    %p40 = scmp.ne.s32.totalorder %s32, %s35
    %p41 = scmp.eq.s32.totalorder %s8, 0
    %p42 = por %p40, %p41
    %p43 = scmp.ne.s32.totalorder %s32, %s35
    %p44 = scmp.eq.s32.totalorder %s13, 1
    %p45 = por %p43, %p44
    %p46 = scmp.ne.s32.totalorder %s35, %s36
    %p47 = scmp.eq.s32.totalorder %s13, 0
    %p48 = por %p46, %p47
    %p49 = scmp.ne.s32.totalorder %s35, %s36
    %p50 = scmp.eq.s32.totalorder %s14, 1
    %p51 = por %p49, %p50
    %p53 = scmp.ne.s32.totalorder %s36, %s52
    %p54 = scmp.eq.s32.totalorder %s14, 0
    %p55 = por %p53, %p54
    %s56 = ssub.s32 %s15, %s27
    %s57 = ssub.s32 %s16, %s23
    %s58 = sor.u32 %s56, %s57
    %p59 = scmp.eq.s32.totalorder %s58, 0
    %s61 = sadd.s32 %s60, 1
    %s62 = scalar_select %p59, %s60, %s61
    %p65 = pneg %p59
    %p66 = scmp.eq.s32.totalorder %s8, 1
    %p67 = por %p65, %p66
    %p68 = scmp.ne.s32.totalorder %s60, %s63
    %p69 = scmp.eq.s32.totalorder %s8, 0
    %p70 = por %p68, %p69
    %p71 = scmp.ne.s32.totalorder %s60, %s63
    %p72 = scmp.eq.s32.totalorder %s13, 1
    %p73 = por %p71, %p72
    %p74 = scmp.ne.s32.totalorder %s63, %s64
    %p75 = scmp.eq.s32.totalorder %s13, 0
    %p76 = por %p74, %p75
    %p77 = scmp.ne.s32.totalorder %s63, %s64
    %p78 = scmp.eq.s32.totalorder %s14, 1
    %p79 = por %p77, %p78
    %p81 = scmp.ne.s32.totalorder %s64, %s80
    %p82 = scmp.eq.s32.totalorder %s14, 0
    %p83 = por %p81, %p82
    %s84 = ssub.s32 %s15, %s27
    %p85 = scmp.eq.s32.totalorder %s84, 0
    %s87 = sadd.s32 %s86, 1
    %s88 = scalar_select %p85, %s86, %s87
    %p91 = pneg %p85
    %p92 = scmp.eq.s32.totalorder %s8, 1
    %p93 = por %p91, %p92
    %p94 = scmp.ne.s32.totalorder %s86, %s89
    %p95 = scmp.eq.s32.totalorder %s8, 0
    %p96 = por %p94, %p95
    %p97 = scmp.ne.s32.totalorder %s86, %s89
    %p98 = scmp.eq.s32.totalorder %s13, 1
    %p99 = por %p97, %p98
    %p100 = scmp.ne.s32.totalorder %s89, %s90
    %p101 = scmp.eq.s32.totalorder %s13, 0
    %p102 = por %p100, %p101
    %p103 = scmp.ne.s32.totalorder %s89, %s90
    %p104 = scmp.eq.s32.totalorder %s14, 1
    %p105 = por %p103, %p104
    %p107 = scmp.ne.s32.totalorder %s90, %s106
    %p108 = scmp.eq.s32.totalorder %s14, 0
    %p109 = por %p107, %p108
    %p110 = scmp.le.s32.totalorder 1, %s8
    %p111 = scmp.lt.s32.totalorder %s8, 3
    %p112 = pnand %p110, %p111
    %p113 = pneg %p112
    // Predicated region
    $region9: #{_content_loss_impl.1} parent=5 // pred_check
      _
    $region10: #{_content_loss_impl.1} parent=5 // pred_check_branch
      %115 = sbr.rel (%p112) target = $region12
    $region11: #{_content_loss_impl.1} parent=5 // pred_region
      %s116 = ssub.s32 %s8, 1
    $region12: #{_content_loss_impl.1} parent=5 // pred_fallthru
      _
    %p117 = scmp.lt.s32.totalorder %s8, 2
    // Predicated region
    $region13: #{_content_loss_impl.1} parent=5 // pred_check
      %p118 = pneg %p117
    $region14: #{_content_loss_impl.1} parent=5 // pred_check_branch
      %120 = sbr.rel (%p118) target = $region16
    $region15: #{_content_loss_impl.1} parent=5 // pred_region
      // Predicated region
      $region17: #{_content_loss_impl.1} parent=15 // pred_check
        %p121 = pneg %p42
      $region18: #{_content_loss_impl.1} parent=15 // pred_check_branch
        %123 = sbr.rel (%p121) target = $region20
      $region19: #{_content_loss_impl.1} parent=15 // pred_region
        %p124 = scmp.lt.s32.totalorder %s15, 0
        %s125 = scalar_select %p124, %s15, 0
        %p126 = scmp.lt.s32.totalorder %s16, 1
        %s127 = scalar_select %p126, %s16, 1
        %s128 = smul.addr %s125, 2
        %s129 = sadd.s32 %s127, %s128
        %s130 = smul.addr %s129, 8
        %s131 = scalar_lea.vmem %s0, %s130
      $region20: #{_content_loss_impl.1} parent=15 // pred_fallthru
        _
      // Predicated region
      $region21: #{_content_loss_impl.1} parent=15 // pred_check
        %p132 = pneg %p70
      $region22: #{_content_loss_impl.1} parent=15 // pred_check_branch
        %134 = sbr.rel (%p132) target = $region24
      $region23: #{_content_loss_impl.1} parent=15 // pred_region
        %p135 = scmp.lt.s32.totalorder %s15, 0
        %s136 = scalar_select %p135, %s15, 0
        %p137 = scmp.lt.s32.totalorder %s16, 1
        %s138 = scalar_select %p137, %s16, 1
        %s139 = smul.addr %s136, 2
        %s140 = sadd.s32 %s138, %s139
        %s141 = smul.addr %s140, 8
        %s142 = scalar_lea.vmem %s1, %s141
      $region24: #{_content_loss_impl.1} parent=15 // pred_fallthru
        _
    $region16: #{_content_loss_impl.1} parent=5 // pred_fallthru
      _
    %p143 = scmp.le.s32.totalorder 1, %s8
    %p144 = scmp.lt.s32.totalorder %s8, 3
    %p145 = pnand %p143, %p144
    %p146 = pneg %p145
    // Predicated region
    $region25: #{_content_loss_impl.1} parent=5 // pred_check
      _
    $region26: #{_content_loss_impl.1} parent=5 // pred_check_branch
      %148 = sbr.rel (%p145) target = $region28
    $region27: #{_content_loss_impl.1} parent=5 // pred_region
      %s149 = ssub.s32 %s8, 1
      %p150 = scmp.lt.s32.totalorder %s17, 0
      %s151 = scalar_select %p150, %s17, 0
      %p152 = scmp.lt.s32.totalorder %s18, 1
      %s153 = scalar_select %p152, %s18, 1
      %s154 = smul.addr %s151, 2
      %s155 = sadd.s32 %s153, %s154
      %s156 = smul.addr %s155, 8
      %s157 = scalar_lea.vmem %s0, %s156
      %p158 = pneg %p48
      %p159 = pneg %p45
      %p160 = scmp.lt.s32.totalorder %s17, 0
      %s161 = scalar_select %p160, %s17, 0
      %p162 = scmp.lt.s32.totalorder %s18, 1
      %s163 = scalar_select %p162, %s18, 1
      %s164 = smul.addr %s161, 2
      %s165 = sadd.s32 %s163, %s164
      %s166 = smul.addr %s165, 8
      %s167 = scalar_lea.vmem %s1, %s166
      %p168 = pneg %p76
      %p169 = pneg %p73
      %p170 = pneg %p102
      %p171 = pneg %p99
      %p172 = scmp.lt.s32.totalorder %s17, 0
      %s173 = scalar_select %p172, %s17, 0
      %s174 = smul.addr %s173, 8
      %s175 = scalar_lea.vmem %s2, %s174
      %p176 = scmp.lt.s32.totalorder %s17, 0
      %s177 = scalar_select %p176, %s17, 0
      %p178 = scmp.lt.s32.totalorder %s18, 1
      %s179 = scalar_select %p178, %s18, 1
      %s180 = smul.addr %s177, 2
      %s181 = sadd.s32 %s179, %s180
      %s182 = smul.addr %s181, 8
      %s183 = scalar_lea.vmem %s0, %s182
      %p184 = scmp.lt.s32.totalorder %s17, 0
      %s185 = scalar_select %p184, %s17, 0
      %p186 = scmp.lt.s32.totalorder %s18, 1
      %s187 = scalar_select %p186, %s18, 1
      %s188 = smul.addr %s185, 2
      %s189 = sadd.s32 %s187, %s188
      %s190 = smul.addr %s189, 8
      %s191 = scalar_lea.vmem %s1, %s190
      %p192 = scmp.lt.s32.totalorder %s17, 0
      %s193 = scalar_select %p192, %s17, 0
      %s194 = smul.addr %s193, 8
      %s195 = scalar_lea.vmem %s2, %s194
      %p196 = scmp.eq.s32.totalorder %s18, 0
      // Predicated region
      $region29: #{_content_loss_impl.1} parent=27 // pred_check
        %p197 = pneg %p196
      $region30: #{_content_loss_impl.1} parent=27 // pred_check_branch
        %199 = sbr.rel (%p197) target = $region32
      $region31: #{_content_loss_impl.1} parent=27 // pred_region
        %200 = vst [vmem:[%s195] sm:$0xff] 0.0
      $region32: #{_content_loss_impl.1} parent=27 // pred_fallthru
        _
      %v201 = vld [vmem:[%s183] sm:$0xff]
      %v202 = vld [vmem:[%s191] sm:$0xff]
      %v203 = vsub.f32 %v201, %v202
      %v204 = vmul.f32 %v203, %v203
      %v205 = vld [vmem:[%s195] sm:$0xff]
      %206 = vadd.xlane.f32.xlu0 %v204
      %v207 = vpop.xlane.xlu0 %206
      %v208 = vrot.slane %v207, 4
      %v209 = vadd.f32 %v207, %v208
      %v210 = vrot.slane %v209, 2
      %v211 = vadd.f32 %v209, %v210
      %v212 = vrot.slane %v211, 1
      %v213 = vadd.f32 %v211, %v212
      %s214 = vtos %v213
      %s215 = smul.f32 %s214, 0.00048828125
      %v216 = vstv %s215
      %v217 = vadd.f32 %v205, %v216
      %218 = vst [vmem:[%s195] sm:$0xff] %v217
      %p219 = scmp.lt.s32.totalorder %s17, 0
      %s220 = scalar_select %p219, %s17, 0
      %s221 = smul.addr %s220, 8
      %s222 = scalar_lea.vmem %s2, %s221
      // Predicated region
      $region33: #{_content_loss_impl.1} parent=27 // pred_check
        %p223 = pneg %p99
      $region34: #{_content_loss_impl.1} parent=27 // pred_check_branch
        %225 = sbr.rel (%p223) target = $region36
      $region35: #{_content_loss_impl.1} parent=27 // pred_region
        _
      $region36: #{_content_loss_impl.1} parent=27 // pred_fallthru
        _
      // Predicated region
      $region37: #{_content_loss_impl.1} parent=27 // pred_check
        %p226 = pneg %p99
      $region38: #{_content_loss_impl.1} parent=27 // pred_check_branch
        %228 = sbr.rel (%p226) target = $region40
      $region39: #{_content_loss_impl.1} parent=27 // pred_region
        %p229 = scmp.lt.s32.totalorder %s17, 0
        %s230 = scalar_select %p229, %s17, 0
        %s231 = smul.addr %s230, 8
        %s232 = scalar_lea.vmem %s2, %s231
      $region40: #{_content_loss_impl.1} parent=27 // pred_fallthru
        _
    $region28: #{_content_loss_impl.1} parent=5 // pred_fallthru
      _
    %p233 = scmp.le.s32.totalorder 2, %s8
    // Predicated region
    $region41: #{_content_loss_impl.1} parent=5 // pred_check
      %p234 = pneg %p233
    $region42: #{_content_loss_impl.1} parent=5 // pred_check_branch
      %236 = sbr.rel (%p234) target = $region44
    $region43: #{_content_loss_impl.1} parent=5 // pred_region
      %s237 = ssub.s32 %s8, 2
    $region44: #{_content_loss_impl.1} parent=5 // pred_fallthru
      _
  $region6: #{_content_loss_impl.1} parent=0 // loop_footer
    %s12 = sadd.s32 1, %s8
  $region7: #{_content_loss_impl.1} parent=0 // loop_footer_branch
    %7 = sbr.rel target = $region3
  $region8: #{_content_loss_impl.1} parent=0 // loop_exit
    _

</llo_original>
